<compile_context>
chip_gen: v7x
topology: tpu7x:2x2x1
jax: 0.10.0
libtpu: 0.0.40
codegen_flags: <defaults>
</compile_context>

<pallas_src>
import jax
import jax.numpy as jnp
from jax.experimental import pallas as pl
from jax.experimental.pallas import tpu as pltpu

LANE = 128
SUBLANE = 8


def _round_up(x, m):
    return ((x + m - 1) // m) * m


def _cdiv(a, b):
    return -(-a // b)


def early_fusion_kernel(text_ref, img_ref,
                        w1t_ref, w1i_ref, b1_ref,
                        w2t_ref, b2t_ref,
                        out_ref):
    # Early fusion without concat:
    #   [text | image] @ [[w1_text], [w1_image]] == text @ w1_text + image @ w1_image
    h = jnp.dot(text_ref[...], w1t_ref[...], preferred_element_type=jnp.float32)
    h = h + jnp.dot(img_ref[...], w1i_ref[...], preferred_element_type=jnp.float32)
    # fc1 bias + ReLU; Dropout in eval mode is the identity.
    h = jnp.maximum(h + b1_ref[...], 0.0)
    # fc2 (eval-BN folded offline), emitted transposed as (O_pad, tb):
    # contraction (w2t[o, h], h[b, h]) -> y_t[o, b] is the native A @ B^T MXU
    # form, so no XLU transpose of h, and the batch tile lands on the lane
    # axis of the output (dense, unmasked vst).
    y_t = jax.lax.dot_general(w2t_ref[...], h, (((1,), (1,)), ((), ())),
                              preferred_element_type=jnp.float32)
    out_ref[...] = (y_t + b2t_ref[...]).astype(out_ref.dtype)


def prepare_kernel_params(params, text_input_size):
    """One-time param prep: split w1, fold eval-BN into fc2, transpose fc2 and
    pad its output dim to a sublane multiple (8)."""
    w1, b1 = params["w1"], params["b1"]
    scale, shift = params["bn_scale"], params["bn_shift"]
    w2, b2 = params["w2"], params["b2"]

    w1_text = w1[:text_input_size]
    w1_image = w1[text_input_size:]

    # (h * scale + shift) @ w2 + b2  ==  h @ (scale^T * w2) + (shift @ w2 + b2)
    w2f = scale.reshape(-1, 1) * w2              # (H, O)
    b2f = b2 + shift @ w2                        # (1, O)

    out_dim = w2.shape[1]
    out_dim_padded = _round_up(out_dim, SUBLANE)  # O lives on sublanes only
    pad = out_dim_padded - out_dim
    if pad:
        w2f = jnp.pad(w2f, ((0, 0), (0, pad)))
        b2f = jnp.pad(b2f, ((0, 0), (0, pad)))

    return dict(w1_text=w1_text, w1_image=w1_image, b1=b1,
                w2_t=jnp.asarray(w2f).T,          # (O_pad, H)
                b2_t=jnp.asarray(b2f).T,          # (O_pad, 1)
                out_dim=out_dim, out_dim_padded=out_dim_padded)


def _pick_batch_tile(B, tile_b):
    """Whole batch when small (single full-extent block, any B allowed);
    otherwise a multiple of 128 (the transposed output's lane dim) chosen so
    the grid has >= 2 steps (v7x TC sharding) and <= tile_b rows per step."""
    if B < 2 * LANE:
        return B
    n_steps = max(2, _cdiv(B, tile_b))
    return _round_up(_cdiv(B, n_steps), LANE)


def early_fusion_forward(text, image, kparams, *, tile_b=4096):
    """text: (B, T), image: (B, I). Returns (B, output_size) in float32."""
    B, T = text.shape
    _, I = image.shape
    H = kparams["w1_text"].shape[1]
    O = kparams["out_dim"]
    Op = kparams["out_dim_padded"]

    tb = _pick_batch_tile(B, tile_b)
    grid = (_cdiv(B, tb),)   # tail block handled by Pallas; no jnp.pad round-trip

    batch_spec = lambda cols: pl.BlockSpec((tb, cols), lambda i: (i, 0))
    resident = lambda shape: pl.BlockSpec(shape, lambda i: (0, 0))

    flops = 2 * B * (T + I) * H + 2 * B * H * Op
    bytes_accessed = 4 * (B * (T + I) + Op * B
                          + (T + I) * H + H + H * Op + Op)

    out_t = pl.pallas_call(
        early_fusion_kernel,
        out_shape=jax.ShapeDtypeStruct((Op, B), jnp.float32),
        grid=grid,
        in_specs=[
            batch_spec(T),           # text        (tb, T)
            batch_spec(I),           # image       (tb, I)
            resident((T, H)),        # w1_text     (resident in VMEM)
            resident((I, H)),        # w1_image
            resident((1, H)),        # b1
            resident((Op, H)),       # w2^T (BN-folded)
            resident((Op, 1)),       # b2^T (BN-folded)
        ],
        out_specs=pl.BlockSpec((Op, tb), lambda i: (0, i)),
        compiler_params=pltpu.CompilerParams(
            dimension_semantics=("parallel",),
            vmem_limit_bytes=48 * 1024 * 1024),
        cost_estimate=pl.CostEstimate(flops=int(flops), transcendentals=0,
                                      bytes_accessed=int(bytes_accessed)),
    )(text, image, kparams["w1_text"], kparams["w1_image"], kparams["b1"],
      kparams["w2_t"], kparams["b2_t"])

    # Tiny (O_pad, B) -> (B, O); far cheaper than slicing a (B, 128) buffer.
    return out_t[:O].T


def init_params(key, text_input_size, image_input_size, output_size, hidden):
    """Parameter init mirroring the module's shapes (hidden = single-int list,
    module default [128]); BatchNorm1d in eval mode with (non-trivial)
    running stats so the offline BN folding is actually exercised."""
    in_dim = text_input_size + image_input_size
    h = hidden[0]
    k1, k2, k3, k4, k5, k6, k7, k8 = jax.random.split(key, 8)

    # Linear 1: PyTorch stores (h, in_dim); we store the transpose (in_dim, h).
    bound1 = 1.0 / jnp.sqrt(in_dim)
    w1 = jax.random.uniform(k1, (in_dim, h), jnp.float32, -bound1, bound1)
    b1 = jax.random.uniform(k2, (1, h), jnp.float32, -bound1, bound1)

    # BatchNorm1d(h) eval-mode folded affine.
    eps = 1e-5
    gamma = jax.random.uniform(k5, (1, h), jnp.float32, 0.5, 1.5)
    beta = 0.1 * jax.random.normal(k6, (1, h), jnp.float32)
    running_mean = 0.1 * jax.random.normal(k7, (1, h), jnp.float32)
    running_var = jax.random.uniform(k8, (1, h), jnp.float32, 0.5, 1.5)
    bn_scale = gamma / jnp.sqrt(running_var + eps)
    bn_shift = beta - running_mean * bn_scale

    # Linear 2: stored as (h, output_size).
    bound2 = 1.0 / jnp.sqrt(h)
    w2 = jax.random.uniform(k3, (h, output_size), jnp.float32, -bound2, bound2)
    b2 = jax.random.uniform(k4, (1, output_size), jnp.float32, -bound2, bound2)

    return dict(w1=w1, b1=b1, bn_scale=bn_scale, bn_shift=bn_shift, w2=w2, b2=b2)


def reference_forward(text, image, params):
    """Pure-JAX reference of the same inference-mode forward."""
    x = jnp.concatenate([text, image], axis=1)
    h = jnp.maximum(x @ params["w1"] + params["b1"], 0.0)
    h = h * params["bn_scale"] + params["bn_shift"]
    return h @ params["w2"] + params["b2"]


if __name__ == "__main__":
    # Shapes consistent with the module: text=32, image=32, hidden=[128], out=10.
    T, I, H, O = 32, 32, 128, 10

    key = jax.random.PRNGKey(0)
    k_text, k_img, k_params = jax.random.split(key, 3)
    params = init_params(k_params, T, I, O, hidden=[H])
    kparams = prepare_kernel_params(params, T)   # one-time: split w1, fold BN, transpose fc2

    # Small single-block case (B=8): block shapes equal full array dims.
    B = 8
    text = jax.random.normal(k_text, (B, T), jnp.float32)
    image = jax.random.normal(k_img, (B, I), jnp.float32)
    out = jax.block_until_ready(early_fusion_forward(text, image, kparams))
    ref = reference_forward(text, image, params)
    assert out.shape == (B, O), out.shape
    assert jnp.allclose(out, ref, atol=1e-4, rtol=1e-4), "mismatch vs reference (B=8)"

    # Multi-step grid + tail block case (B=300 -> tb=256, grid=2, 44-row tail):
    # exercises the grid>=2 / cdiv tail-handling path used at large batch.
    B2 = 300
    text2 = jax.random.normal(k_text, (B2, T), jnp.float32)
    image2 = jax.random.normal(k_img, (B2, I), jnp.float32)
    out2 = jax.block_until_ready(early_fusion_forward(text2, image2, kparams))
    ref2 = reference_forward(text2, image2, params)
    assert out2.shape == (B2, O), out2.shape
    assert jnp.allclose(out2, ref2, atol=1e-4, rtol=1e-4), "mismatch vs reference (B=300)"

    print("KERNEL_OK")
</pallas_src>

<mosaic_0001>
module attributes {stable_mosaic.version = 11 : i64} {
  func.func @early_fusion_kernel(%arg0: i32, %arg1: memref<8x32xf32, #tpu.memory_space<vmem>>, %arg2: memref<8x32xf32, #tpu.memory_space<vmem>>, %arg3: memref<32x128xf32, #tpu.memory_space<vmem>>, %arg4: memref<32x128xf32, #tpu.memory_space<vmem>>, %arg5: memref<1x128xf32, #tpu.memory_space<vmem>>, %arg6: memref<16x128xf32, #tpu.memory_space<vmem>>, %arg7: memref<16x1xf32, #tpu.memory_space<vmem>>, %arg8: memref<16x8xf32, #tpu.memory_space<vmem>>) attributes {dimension_semantics = [#tpu.dimension_semantics<parallel>], iteration_bounds = array<i64: 1>, scalar_prefetch = 0 : i64, scratch_operands = 0 : i64, tpu.core_type = #tpu.core_type<tc>, window_params = [{transform_indices = @transform_0, window_bounds = array<i64: 8, 32>}, {transform_indices = @transform_1, window_bounds = array<i64: 8, 32>}, {pipeline_mode = #tpu.pipeline_mode<synchronous>, transform_indices = @transform_2, window_bounds = array<i64: 32, 128>}, {pipeline_mode = #tpu.pipeline_mode<synchronous>, transform_indices = @transform_3, window_bounds = array<i64: 32, 128>}, {pipeline_mode = #tpu.pipeline_mode<synchronous>, transform_indices = @transform_4, window_bounds = array<i64: 1, 128>}, {pipeline_mode = #tpu.pipeline_mode<synchronous>, transform_indices = @transform_5, window_bounds = array<i64: 16, 128>}, {pipeline_mode = #tpu.pipeline_mode<synchronous>, transform_indices = @transform_6, window_bounds = array<i64: 16, 1>}, {transform_indices = @transform_7, window_bounds = array<i64: 16, 8>}]} {
    %c0 = arith.constant 0 : index
    %c0_0 = arith.constant 0 : index
    %0 = vector.load %arg1[%c0, %c0_0] : memref<8x32xf32, #tpu.memory_space<vmem>>, vector<8x32xf32>
    %c0_1 = arith.constant 0 : index
    %c0_2 = arith.constant 0 : index
    %1 = vector.load %arg3[%c0_1, %c0_2] : memref<32x128xf32, #tpu.memory_space<vmem>>, vector<32x128xf32>
    %cst = arith.constant dense<0.000000e+00> : vector<8x128xf32>
    %2 = tpu.matmul %0, %1, %cst {dimension_numbers = #tpu.dot_dimension_numbers<[1], [0], [0], [1], [0, 0, 1, 1], [], []>} : vector<8x32xf32>, vector<32x128xf32>, vector<8x128xf32> -> vector<8x128xf32>
    %c0_3 = arith.constant 0 : index
    %c0_4 = arith.constant 0 : index
    %3 = vector.load %arg2[%c0_3, %c0_4] : memref<8x32xf32, #tpu.memory_space<vmem>>, vector<8x32xf32>
    %c0_5 = arith.constant 0 : index
    %c0_6 = arith.constant 0 : index
    %4 = vector.load %arg4[%c0_5, %c0_6] : memref<32x128xf32, #tpu.memory_space<vmem>>, vector<32x128xf32>
    %cst_7 = arith.constant dense<0.000000e+00> : vector<8x128xf32>
    %5 = tpu.matmul %3, %4, %cst_7 {dimension_numbers = #tpu.dot_dimension_numbers<[1], [0], [0], [1], [0, 0, 1, 1], [], []>} : vector<8x32xf32>, vector<32x128xf32>, vector<8x128xf32> -> vector<8x128xf32>
    %6 = arith.addf %2, %5 : vector<8x128xf32>
    %c0_8 = arith.constant 0 : index
    %c0_9 = arith.constant 0 : index
    %7 = vector.load %arg5[%c0_8, %c0_9] : memref<1x128xf32, #tpu.memory_space<vmem>>, vector<1x128xf32>
    %8 = vector.broadcast %7 : vector<1x128xf32> to vector<8x128xf32>
    %9 = arith.addf %6, %8 : vector<8x128xf32>
    %cst_10 = arith.constant 0.000000e+00 : f32
    %10 = vector.broadcast %cst_10 : f32 to vector<8x128xf32>
    %11 = arith.maximumf %9, %10 : vector<8x128xf32>
    %c0_11 = arith.constant 0 : index
    %c0_12 = arith.constant 0 : index
    %12 = vector.load %arg6[%c0_11, %c0_12] : memref<16x128xf32, #tpu.memory_space<vmem>>, vector<16x128xf32>
    %cst_13 = arith.constant dense<0.000000e+00> : vector<16x8xf32>
    %13 = tpu.matmul %12, %11, %cst_13 {dimension_numbers = #tpu.dot_dimension_numbers<[1], [1], [0], [0], [0, 0, 1, 0], [], []>} : vector<16x128xf32>, vector<8x128xf32>, vector<16x8xf32> -> vector<16x8xf32>
    %c0_14 = arith.constant 0 : index
    %c0_15 = arith.constant 0 : index
    %14 = vector.load %arg7[%c0_14, %c0_15] : memref<16x1xf32, #tpu.memory_space<vmem>>, vector<16x1xf32>
    %15 = vector.broadcast %14 : vector<16x1xf32> to vector<16x8xf32>
    %16 = arith.addf %13, %15 : vector<16x8xf32>
    %c0_16 = arith.constant 0 : index
    %c0_17 = arith.constant 0 : index
    %17 = vector.load %arg8[%c0_16, %c0_17] : memref<16x8xf32, #tpu.memory_space<vmem>>, vector<16x8xf32>
    tpu.vector_store %arg8[%c0_16, %c0_17], %16 {strides = array<i32>} : memref<16x8xf32, #tpu.memory_space<vmem>>, vector<16x8xf32>,
    return
  }
  func.func @transform_0(%arg0: i32) -> (i32, i32) {
    %c0_i32 = arith.constant 0 : i32
    %c0_i32_0 = arith.constant 0 : i32
    return %arg0, %c0_i32 : i32, i32
  }
  func.func @transform_1(%arg0: i32) -> (i32, i32) {
    %c0_i32 = arith.constant 0 : i32
    %c0_i32_0 = arith.constant 0 : i32
    return %arg0, %c0_i32 : i32, i32
  }
  func.func @transform_2(%arg0: i32) -> (i32, i32) {
    %c0_i32 = arith.constant 0 : i32
    %c0_i32_0 = arith.constant 0 : i32
    %c0_i32_1 = arith.constant 0 : i32
    return %c0_i32, %c0_i32_0 : i32, i32
  }
  func.func @transform_3(%arg0: i32) -> (i32, i32) {
    %c0_i32 = arith.constant 0 : i32
    %c0_i32_0 = arith.constant 0 : i32
    %c0_i32_1 = arith.constant 0 : i32
    return %c0_i32, %c0_i32_0 : i32, i32
  }
  func.func @transform_4(%arg0: i32) -> (i32, i32) {
    %c0_i32 = arith.constant 0 : i32
    %c0_i32_0 = arith.constant 0 : i32
    %c0_i32_1 = arith.constant 0 : i32
    return %c0_i32, %c0_i32_0 : i32, i32
  }
  func.func @transform_5(%arg0: i32) -> (i32, i32) {
    %c0_i32 = arith.constant 0 : i32
    %c0_i32_0 = arith.constant 0 : i32
    %c0_i32_1 = arith.constant 0 : i32
    return %c0_i32, %c0_i32_0 : i32, i32
  }
  func.func @transform_6(%arg0: i32) -> (i32, i32) {
    %c0_i32 = arith.constant 0 : i32
    %c0_i32_0 = arith.constant 0 : i32
    %c0_i32_1 = arith.constant 0 : i32
    return %c0_i32, %c0_i32_0 : i32, i32
  }
  func.func @transform_7(%arg0: i32) -> (i32, i32) {
    %c0_i32 = arith.constant 0 : i32
    %c0_i32_0 = arith.constant 0 : i32
    return %c0_i32, %arg0 : i32, i32
  }
}

</mosaic_0001>

<llo_original>
// kernel: tpu_custom_call.1
$region0: #{tpu_custom_call.1}
  #allocation0 [shape = 'u32[]', space=smem, size = 0x4, offset = 0x4, fixed_abs, tag = 'smem constant byte address 0x4 - core index']
  #allocation1 [shape = 'u32[144,128]{1,0:T(1,128)}', space=vmem, size = 0x12000, scoped, tag = 'internal scratch']
  %s0 = inlined_call_operand.vmem [shape: f32[8,32], index: 0, kind: input, shape index: {}]
  %s1 = inlined_call_operand.vmem [shape: f32[8,32], index: 1, kind: input, shape index: {}]
  %s2 = inlined_call_operand.hbm [shape: f32[32,128], index: 2, kind: input, shape index: {}]
  %s3 = inlined_call_operand.hbm [shape: f32[32,128], index: 3, kind: input, shape index: {}]
  %s4 = inlined_call_operand.hbm [shape: f32[1,128], index: 4, kind: input, shape index: {}]
  %s5 = inlined_call_operand.vmem [shape: f32[16,128], index: 5, kind: input, shape index: {}]
  %s6 = inlined_call_operand.vmem [shape: f32[16,1], index: 6, kind: input, shape index: {}]
  %s7 = inlined_call_operand.vmem [shape: f32[16,8], index: 7, kind: output, shape index: {}]
  %s8 = sld [smem:[#allocation0]]
  $region50: #{tpu_custom_call.1} parent=0
    _
  %s10 = ssub.s32 1, %s8
  %s11 = scalar_select 0, %s10, %s8
  $region1: #{tpu_custom_call.1} parent=0
    #allocation2 [shape = 'u8[16384]{0}', space=vmem, size = 0x4000, scoped, tag = 'input window, operand 2, single buffered']
    #allocation3 [shape = 's32[1]{0}', space=sflag, size = 0x4, scoped, tag = 'scoped memory for tpu_custom_call.1']
    #allocation4 [shape = 'u8[16384]{0}', space=vmem, size = 0x4000, scoped, tag = 'input window, operand 3, single buffered']
    #allocation5 [shape = 's32[1]{0}', space=sflag, size = 0x4, scoped, tag = 'scoped memory for tpu_custom_call.1']
    #allocation6 [shape = 'u8[512]{0}', space=vmem, size = 0x400, scoped, tag = 'input window, operand 4, single buffered']
    %12 = vsyncpa [#allocation3], 0
    %13 = vsyncpa [#allocation5], 0
    // Predicated region
    $region2: #{tpu_custom_call.1} parent=1 // pred_check
      _
    $region3: #{tpu_custom_call.1} parent=1 // pred_check_branch
      %15 = sbr.rel (0) target = $region5
    $region4: #{tpu_custom_call.1} parent=1 // pred_region
      _
    $region5: #{tpu_custom_call.1} parent=1 // pred_fallthru
      _
    // Predicated region
    $region6: #{tpu_custom_call.1} parent=1 // pred_check
      _
    $region7: #{tpu_custom_call.1} parent=1 // pred_check_branch
      %17 = sbr.rel (0) target = $region9
    $region8: #{tpu_custom_call.1} parent=1 // pred_region
      _
    $region9: #{tpu_custom_call.1} parent=1 // pred_fallthru
      _
    // Predicated region
    $region10: #{tpu_custom_call.1} parent=1 // pred_check
      _
    $region11: #{tpu_custom_call.1} parent=1 // pred_check_branch
      %19 = sbr.rel (0) target = $region13
    $region12: #{tpu_custom_call.1} parent=1 // pred_region
      %s21 = ssub.s32 512, 512
      %22 = vsyncadd [#allocation3], %s21
      %s23 = sshll.u32 [#allocation2], 4
      %s24 = int_to_ptr.vmem [resolvable:$true] %s23
      %29 = dma.hbm_to_vmem [thread:$0]  %s2, 512, %s24, [#allocation3], 128, 128, 8
    $region13: #{tpu_custom_call.1} parent=1 // pred_fallthru
      _
    // Predicated region
    $region14: #{tpu_custom_call.1} parent=1 // pred_check
      _
    $region15: #{tpu_custom_call.1} parent=1 // pred_check_branch
      %31 = sbr.rel (0) target = $region17
    $region16: #{tpu_custom_call.1} parent=1 // pred_region
      %s33 = ssub.s32 512, 512
      %34 = vsyncadd [#allocation5], %s33
      %s35 = sshll.u32 [#allocation4], 4
      %s36 = int_to_ptr.vmem [resolvable:$true] %s35
      %41 = dma.hbm_to_vmem [thread:$0]  %s3, 512, %s36, [#allocation5], 128, 128, 8
    $region17: #{tpu_custom_call.1} parent=1 // pred_fallthru
      _
    // Predicated region
    $region18: #{tpu_custom_call.1} parent=1 // pred_check
      _
    $region19: #{tpu_custom_call.1} parent=1 // pred_check_branch
      %43 = sbr.rel (0) target = $region21
    $region20: #{tpu_custom_call.1} parent=1 // pred_region
      %s45 = ssub.s32 16, 16
      %46 = vsyncadd [#allocation5], %s45
      %s48 = sshll.u32 [#allocation6], 4
      %s49 = int_to_ptr.vmem [resolvable:$true] %s48
      %51 = dma.hbm_to_vmem [thread:$0]  %s4, 16, %s49, [#allocation5]
    $region21: #{tpu_custom_call.1} parent=1 // pred_fallthru
      _
    // Predicated region
    $region22: #{tpu_custom_call.1} parent=1 // pred_check
      _
    $region23: #{tpu_custom_call.1} parent=1 // pred_check_branch
      %53 = sbr.rel (0) target = $region25
    $region24: #{tpu_custom_call.1} parent=1 // pred_region
      _
    $region25: #{tpu_custom_call.1} parent=1 // pred_fallthru
      _
    // Predicated region
    $region26: #{tpu_custom_call.1} parent=1 // pred_check
      _
    $region27: #{tpu_custom_call.1} parent=1 // pred_check_branch
      %55 = sbr.rel (0) target = $region29
    $region28: #{tpu_custom_call.1} parent=1 // pred_region
      _
    $region29: #{tpu_custom_call.1} parent=1 // pred_fallthru
      _
    // Predicated region
    $region30: #{tpu_custom_call.1} parent=1 // pred_check
      _
    $region31: #{tpu_custom_call.1} parent=1 // pred_check_branch
      %57 = sbr.rel (0) target = $region33
    $region32: #{tpu_custom_call.1} parent=1 // pred_region
      %58 = dma.done [#allocation3], 512
    $region33: #{tpu_custom_call.1} parent=1 // pred_fallthru
      _
    // Predicated region
    $region34: #{tpu_custom_call.1} parent=1 // pred_check
      _
    $region35: #{tpu_custom_call.1} parent=1 // pred_check_branch
      %60 = sbr.rel (0) target = $region37
    $region36: #{tpu_custom_call.1} parent=1 // pred_region
      %61 = dma.done [#allocation5], 512
    $region37: #{tpu_custom_call.1} parent=1 // pred_fallthru
      _
    // Predicated region
    $region38: #{tpu_custom_call.1} parent=1 // pred_check
      _
    $region39: #{tpu_custom_call.1} parent=1 // pred_check_branch
      %63 = sbr.rel (0) target = $region41
    $region40: #{tpu_custom_call.1} parent=1 // pred_region
      %64 = dma.done [#allocation5], 16
    $region41: #{tpu_custom_call.1} parent=1 // pred_fallthru
      _
    %v65 = vld [vmem:[%s0] sm:$0xff]
    %v66 = vld [vmem:[#allocation2] sm:$0xff]
    %v67 = vld [vmem:[#allocation2 + $0x8] sm:$0xff]
    %v68 = vld [vmem:[#allocation2 + $0x10] sm:$0xff]
    %v69 = vld [vmem:[#allocation2 + $0x18] sm:$0xff]
    %v70 = vld [vmem:[%s1] sm:$0xff]
    %v71 = vld [vmem:[#allocation4] sm:$0xff]
    %v72 = vld [vmem:[#allocation4 + $0x8] sm:$0xff]
    %v73 = vld [vmem:[#allocation4 + $0x10] sm:$0xff]
    %v74 = vld [vmem:[#allocation4 + $0x18] sm:$0xff]
    %vm75 = vcmask 261120
    %v77 = vsel %vm75, %v70, 0
    %79 = vmatprep.subr.mxu0 0.0
    %80 = vmatpush1.msra.mxu0 %v71
    %81 = vmatprep.subr.mxu0 0.0
    %82 = vmatpush1.msra.mxu0 %v72
    %83 = vmatprep.subr.mxu0 0.0
    %84 = vmatpush1.msra.mxu0 %v73
    %85 = vmatprep.subr.mxu0 0.0
    %86 = vmatpush1.msra.mxu0 %v74
    %87 = vmatprep.subr.mxu0 0.0
    %88 = vmatpush1.msra.mxu0 0.0
    %89 = vmatprep.subr.mxu0 0.0
    %90 = vmatpush1.msra.mxu0 0.0
    %91 = vmatprep.subr.mxu0 0.0
    %92 = vmatpush1.msra.mxu0 0.0
    %93 = vmatprep.subr.mxu0 0.0
    %94 = vmatpush1.msra.mxu0 0.0
    %95 = vmatprep.subr.mxu0 0.0
    %96 = vmatpush1.msra.mxu0 0.0
    %97 = vmatprep.subr.mxu0 0.0
    %98 = vmatpush1.msra.mxu0 0.0
    %99 = vmatprep.subr.mxu0 0.0
    %100 = vmatpush1.msra.mxu0 0.0
    %101 = vmatprep.subr.mxu0 0.0
    %102 = vmatpush1.msra.mxu0 0.0
    %103 = vmatprep.subr.mxu0 0.0
    %104 = vmatpush1.msra.mxu0 0.0
    %105 = vmatprep.subr.mxu0 0.0
    %106 = vmatpush1.msra.mxu0 0.0
    %107 = vmatprep.subr.mxu0 0.0
    %108 = vmatpush1.msra.mxu0 0.0
    %109 = vmatprep.subr.mxu0 0.0
    %110 = vmatpush1.msra.mxu0 0.0
    %111 = vmatprep.subr.mxu0 0.0
    %112 = vmatpush1.msra.mxu0 0.0
    %113 = vmatprep.subr.mxu0 0.0
    %114 = vmatpush1.msra.mxu0 0.0
    %115 = vmatprep.subr.mxu0 0.0
    %116 = vmatpush1.msra.mxu0 0.0
    %117 = vmatprep.subr.mxu0 0.0
    %118 = vmatpush1.msra.mxu0 0.0
    %119 = vmatprep.subr.mxu0 0.0
    %120 = vmatpush1.msra.mxu0 0.0
    %121 = vmatprep.subr.mxu0 0.0
    %122 = vmatpush1.msra.mxu0 0.0
    %123 = vmatprep.subr.mxu0 0.0
    %124 = vmatpush1.msra.mxu0 0.0
    %125 = vmatprep.subr.mxu0 0.0
    %126 = vmatpush1.msra.mxu0 0.0
    %127 = vmatprep.subr.mxu0 0.0
    %128 = vmatpush1.msra.mxu0 0.0
    %129 = vmatprep.subr.mxu0 0.0
    %130 = vmatpush1.msra.mxu0 0.0
    %131 = vmatprep.subr.mxu0 0.0
    %132 = vmatpush1.msra.mxu0 0.0
    %133 = vmatprep.subr.mxu0 0.0
    %134 = vmatpush1.msra.mxu0 0.0
    %135 = vmatprep.subr.mxu0 0.0
    %136 = vmatpush1.msra.mxu0 0.0
    %137 = vmatprep.subr.mxu0 0.0
    %138 = vmatpush1.msra.mxu0 0.0
    %139 = vmatprep.subr.mxu0 0.0
    %140 = vmatpush1.msra.mxu0 0.0
    %141 = vmatprep.subr.mxu0 0.0
    %142 = vmatpush1.msra.mxu0 0.0
    %143 = vmatprep.mubr.f32.mxu0 0.0
    %144 = vmatmul.mubr.f32.gmra.mrb[0].mxu0 %v77
    %v145 = vpop.f32.mrb[0].mxu0
    %v146 = vadd.f32 0.0, %v145
    %v147 = vpop.f32.mrb[0].mxu0
    %148 = vdwg.mxu0
    %v150 = vsel %vm75, %v65, 0
    %152 = vmatprep.subr.mxu0 0.0
    %153 = vmatpush1.msra.mxu0 %v66
    %154 = vmatprep.subr.mxu0 0.0
    %155 = vmatpush1.msra.mxu0 %v67
    %156 = vmatprep.subr.mxu0 0.0
    %157 = vmatpush1.msra.mxu0 %v68
    %158 = vmatprep.subr.mxu0 0.0
    %159 = vmatpush1.msra.mxu0 %v69
    %160 = vmatprep.subr.mxu0 0.0
    %161 = vmatpush1.msra.mxu0 0.0
    %162 = vmatprep.subr.mxu0 0.0
    %163 = vmatpush1.msra.mxu0 0.0
    %164 = vmatprep.subr.mxu0 0.0
    %165 = vmatpush1.msra.mxu0 0.0
    %166 = vmatprep.subr.mxu0 0.0
    %167 = vmatpush1.msra.mxu0 0.0
    %168 = vmatprep.subr.mxu0 0.0
    %169 = vmatpush1.msra.mxu0 0.0
    %170 = vmatprep.subr.mxu0 0.0
    %171 = vmatpush1.msra.mxu0 0.0
    %172 = vmatprep.subr.mxu0 0.0
    %173 = vmatpush1.msra.mxu0 0.0
    %174 = vmatprep.subr.mxu0 0.0
    %175 = vmatpush1.msra.mxu0 0.0
    %176 = vmatprep.subr.mxu0 0.0
    %177 = vmatpush1.msra.mxu0 0.0
    %178 = vmatprep.subr.mxu0 0.0
    %179 = vmatpush1.msra.mxu0 0.0
    %180 = vmatprep.subr.mxu0 0.0
    %181 = vmatpush1.msra.mxu0 0.0
    %182 = vmatprep.subr.mxu0 0.0
    %183 = vmatpush1.msra.mxu0 0.0
    %184 = vmatprep.subr.mxu0 0.0
    %185 = vmatpush1.msra.mxu0 0.0
    %186 = vmatprep.subr.mxu0 0.0
    %187 = vmatpush1.msra.mxu0 0.0
    %188 = vmatprep.subr.mxu0 0.0
    %189 = vmatpush1.msra.mxu0 0.0
    %190 = vmatprep.subr.mxu0 0.0
    %191 = vmatpush1.msra.mxu0 0.0
    %192 = vmatprep.subr.mxu0 0.0
    %193 = vmatpush1.msra.mxu0 0.0
    %194 = vmatprep.subr.mxu0 0.0
    %195 = vmatpush1.msra.mxu0 0.0
    %196 = vmatprep.subr.mxu0 0.0
    %197 = vmatpush1.msra.mxu0 0.0
    %198 = vmatprep.subr.mxu0 0.0
    %199 = vmatpush1.msra.mxu0 0.0
    %200 = vmatprep.subr.mxu0 0.0
    %201 = vmatpush1.msra.mxu0 0.0
    %202 = vmatprep.subr.mxu0 0.0
    %203 = vmatpush1.msra.mxu0 0.0
    %204 = vmatprep.subr.mxu0 0.0
    %205 = vmatpush1.msra.mxu0 0.0
    %206 = vmatprep.subr.mxu0 0.0
    %207 = vmatpush1.msra.mxu0 0.0
    %208 = vmatprep.subr.mxu0 0.0
    %209 = vmatpush1.msra.mxu0 0.0
    %210 = vmatprep.subr.mxu0 0.0
    %211 = vmatpush1.msra.mxu0 0.0
    %212 = vmatprep.subr.mxu0 0.0
    %213 = vmatpush1.msra.mxu0 0.0
    %214 = vmatprep.subr.mxu0 0.0
    %215 = vmatpush1.msra.mxu0 0.0
    %216 = vmatprep.mubr.f32.mxu0 0.0
    %217 = vmatmul.mubr.f32.gmra.mrb[0].mxu0 %v150
    %v218 = vpop.f32.mrb[0].mxu0
    %v219 = vadd.f32 %v146, %v218
    %v220 = vpop.f32.mrb[0].mxu0
    %221 = vdwg.mxu0
    %v222 = vld [vmem:[#allocation6] sm:$0x1]
    %v224 = vlaneseq
    %v225 = vshrl.u32 %v224, 7
    %v226 = vsub.s32 0, %v225
    %v227 = vrot.slane %v222, %v226
    %v229 = vadd.f32 %v219, %v227
    %v230 = vmax.f32 %v229, 0.0
    %v231 = vld [vmem:[%s5] sm:$0xff]
    %v232 = vld [vmem:[%s5 + $0x8] sm:$0xff]
    %v233 = vld [vmem:[%s6] sm:$0xff]
    %v234 = vld [vmem:[%s6 + $0x8] sm:$0xff]
    %236 = vset.pattern.permute.xlu0 0
    %237 = vperm.xlu0 %236, %v233
    %v238 = vpop.permute.xlu0 %237
    %241 = vset.pattern.permute.xlu0 0
    %242 = vperm.xlu0 %241, %v234
    %v243 = vpop.permute.xlu0 %242
    %245 = vmatprep.subr.mxu0 0.0
    %246 = vmatpush1.xpose.msra.mxu0 %v230
    %247 = vmatprep.subr.mxu0 0.0
    %248 = vmatpush1.xpose.msra.mxu0 0.0
    %249 = vmatprep.subr.mxu0 0.0
    %250 = vmatpush1.xpose.msra.mxu0 0.0
    %251 = vmatprep.subr.mxu0 0.0
    %252 = vmatpush1.xpose.msra.mxu0 0.0
    %253 = vmatprep.subr.mxu0 0.0
    %254 = vmatpush1.xpose.msra.mxu0 0.0
    %255 = vmatprep.subr.mxu0 0.0
    %256 = vmatpush1.xpose.msra.mxu0 0.0
    %257 = vmatprep.subr.mxu0 0.0
    %258 = vmatpush1.xpose.msra.mxu0 0.0
    %259 = vmatprep.subr.mxu0 0.0
    %260 = vmatpush1.xpose.msra.mxu0 0.0
    %261 = vmatprep.subr.mxu0 0.0
    %262 = vmatpush1.xpose.msra.mxu0 0.0
    %263 = vmatprep.subr.mxu0 0.0
    %264 = vmatpush1.xpose.msra.mxu0 0.0
    %265 = vmatprep.subr.mxu0 0.0
    %266 = vmatpush1.xpose.msra.mxu0 0.0
    %267 = vmatprep.subr.mxu0 0.0
    %268 = vmatpush1.xpose.msra.mxu0 0.0
    %269 = vmatprep.subr.mxu0 0.0
    %270 = vmatpush1.xpose.msra.mxu0 0.0
    %271 = vmatprep.subr.mxu0 0.0
    %272 = vmatpush1.xpose.msra.mxu0 0.0
    %273 = vmatprep.subr.mxu0 0.0
    %274 = vmatpush1.xpose.msra.mxu0 0.0
    %275 = vmatprep.subr.mxu0 0.0
    %276 = vmatpush1.xpose.msra.mxu0 0.0
    %277 = vmatprep.subr.mxu0 0.0
    %278 = vmatpush1.xpose.msra.mxu0 0.0
    %279 = vmatprep.subr.mxu0 0.0
    %280 = vmatpush1.xpose.msra.mxu0 0.0
    %281 = vmatprep.subr.mxu0 0.0
    %282 = vmatpush1.xpose.msra.mxu0 0.0
    %283 = vmatprep.subr.mxu0 0.0
    %284 = vmatpush1.xpose.msra.mxu0 0.0
    %285 = vmatprep.subr.mxu0 0.0
    %286 = vmatpush1.xpose.msra.mxu0 0.0
    %287 = vmatprep.subr.mxu0 0.0
    %288 = vmatpush1.xpose.msra.mxu0 0.0
    %289 = vmatprep.subr.mxu0 0.0
    %290 = vmatpush1.xpose.msra.mxu0 0.0
    %291 = vmatprep.subr.mxu0 0.0
    %292 = vmatpush1.xpose.msra.mxu0 0.0
    %293 = vmatprep.subr.mxu0 0.0
    %294 = vmatpush1.xpose.msra.mxu0 0.0
    %295 = vmatprep.subr.mxu0 0.0
    %296 = vmatpush1.xpose.msra.mxu0 0.0
    %297 = vmatprep.subr.mxu0 0.0
    %298 = vmatpush1.xpose.msra.mxu0 0.0
    %299 = vmatprep.subr.mxu0 0.0
    %300 = vmatpush1.xpose.msra.mxu0 0.0
    %301 = vmatprep.subr.mxu0 0.0
    %302 = vmatpush1.xpose.msra.mxu0 0.0
    %303 = vmatprep.subr.mxu0 0.0
    %304 = vmatpush1.xpose.msra.mxu0 0.0
    %305 = vmatprep.subr.mxu0 0.0
    %306 = vmatpush1.xpose.msra.mxu0 0.0
    %307 = vmatprep.subr.mxu0 0.0
    %308 = vmatpush1.xpose.msra.mxu0 0.0
    %309 = vmatprep.mubr.f32.mxu0 0.0
    %310 = vmatmul.mubr.f32.gmra.mrb[0].mxu0 %v231
    %v311 = vpop.f32.mrb[0].mxu0
    %v312 = vadd.f32 %v238, %v311
    %v313 = vpop.f32.mrb[0].mxu0
    %314 = vmatprep.mubr.f32.mxu0 0.0
    %315 = vmatmul.mubr.f32.gmra.mrb[0].mxu0 %v232
    %v316 = vpop.f32.mrb[0].mxu0
    %v317 = vadd.f32 %v243, %v316
    %v318 = vpop.f32.mrb[0].mxu0
    %319 = vdwg.mxu0
    %vm320 = vcmask 64512
    %321 = vst.msk [vmem:[%s7] sm:$0xff] %vm320, %v312
    %322 = vst.msk [vmem:[%s7 + $0x8] sm:$0xff] %vm320, %v317
    // Predicated region
    $region42: #{tpu_custom_call.1} parent=1 // pred_check
      _
    $region43: #{tpu_custom_call.1} parent=1 // pred_check_branch
      %324 = sbr.rel (0) target = $region45
    $region44: #{tpu_custom_call.1} parent=1 // pred_region
      _
    $region45: #{tpu_custom_call.1} parent=1 // pred_fallthru
      _
    // Predicated region
    $region46: #{tpu_custom_call.1} parent=1 // pred_check
      _
    $region47: #{tpu_custom_call.1} parent=1 // pred_check_branch
      %326 = sbr.rel (0) target = $region49
    $region48: #{tpu_custom_call.1} parent=1 // pred_region
      _
    $region49: #{tpu_custom_call.1} parent=1 // pred_fallthru
      _
    %327 = vsyncpa [#allocation3], 1
    %328 = vsyncpa [#allocation5], 1

</llo_original>
